<compile_context>
chip_gen: v5e
topology: v5e:2x2
jax: 0.10.0
libtpu: 0.0.40
codegen_flags: <defaults>
</compile_context>

<pallas_src>
import functools

import jax
import jax.numpy as jnp
from jax.experimental import pallas as pl
from jax.experimental.pallas import tpu as pltpu


def _round_up(x, m):
    return ((x + m - 1) // m) * m


def _vae_loss_kernel(xp_ref, xt_ref, mu_ref, lv_ref, out_ref, acc_ref, *, inv_n):
    # xp_ref/xt_ref: [8, TILE_C] slab tile; mu_ref/lv_ref: [N, D] (resident);
    # out_ref: [1, 1, 1] per-split partial; acc_ref: [1, 1] f32 accumulator.
    i = pl.program_id(0)                   # split across TensorCores ("parallel")
    k = pl.program_id(1)                   # reduction over column tiles ("arbitrary")
    last = pl.num_programs(1) - 1

    @pl.when(k == 0)
    def _init():
        acc_ref[...] = jnp.zeros_like(acc_ref)

    xp = xp_ref[...].astype(jnp.float32)
    xt = xt_ref[...].astype(jnp.float32)

    # BCE with reduction='none' (PyTorch clamps the log terms at -100), fused:
    #   -(xt*log(p) + (1-xt)*log(1-p)) == -(xt*(log_p - log_1mp) + log_1mp)
    log_p = jnp.maximum(jnp.log(xp), -100.0)
    log_1mp = jnp.maximum(jnp.log(1.0 - xp), -100.0)
    bce = -(xt * (log_p - log_1mp) + log_1mp)          # [8, TILE_C]

    acc_ref[...] += jnp.sum(bce)

    # KL divergence: tiny [N, D] term, computed exactly once (last step, split 0).
    @pl.when(jnp.logical_and(k == last, i == 0))
    def _add_kl():
        mu = mu_ref[...].astype(jnp.float32)
        lv = lv_ref[...].astype(jnp.float32)
        acc_ref[...] += -0.5 * jnp.sum(1.0 + lv - mu * mu - jnp.exp(lv))

    @pl.when(k == last)
    def _finalize():
        out_ref[...] = jnp.broadcast_to(acc_ref[...] * inv_n, (1, 1, 1))


def vae_loss(x_pred, mu, logvar, x_true, *, max_tile_c=32768):
    """Pallas implementation of VAELoss(BCELoss(reduction='none')).forward."""
    n = x_pred.shape[0]
    d = mu.shape[1]

    ROWS = 8        # sublane-dense slab height
    NSPLIT = 2      # megacore split on v7x; harmless (sequential) elsewhere

    xp_flat = x_pred.reshape(-1)
    xt_flat = x_true.reshape(-1)
    total = xp_flat.shape[0]

    cols_needed = -(-total // ROWS)
    tile_c = min(max_tile_c, _round_up(cols_needed, 128))          # lane multiple
    tiles_total = _round_up(-(-cols_needed // tile_c), NSPLIT)
    tiles_per_split = tiles_total // NSPLIT
    ctot = tiles_total * tile_c

    pad = ROWS * ctot - total
    if pad:
        # BCE(pred=0, target=0) == 0, so zero padding does not change the sum.
        xp_flat = jnp.pad(xp_flat, (0, pad))
        xt_flat = jnp.pad(xt_flat, (0, pad))
    xp2 = xp_flat.reshape(ROWS, ctot)
    xt2 = xt_flat.reshape(ROWS, ctot)

    slab_map = lambda i, k: (0, i * tiles_per_split + k)

    partials = pl.pallas_call(
        functools.partial(_vae_loss_kernel, inv_n=1.0 / n),
        out_shape=jax.ShapeDtypeStruct((NSPLIT, 1, 1), jnp.float32),
        grid_spec=pltpu.PrefetchScalarGridSpec(
            num_scalar_prefetch=0,
            grid=(NSPLIT, tiles_per_split),
            in_specs=[
                pl.BlockSpec((ROWS, tile_c), slab_map),            # x_pred slab
                pl.BlockSpec((ROWS, tile_c), slab_map),            # x_true slab
                pl.BlockSpec((n, d), lambda i, k: (0, 0)),         # mu (resident)
                pl.BlockSpec((n, d), lambda i, k: (0, 0)),         # logvar (resident)
            ],
            out_specs=pl.BlockSpec((1, 1, 1), lambda i, k: (i, 0, 0)),
            scratch_shapes=[pltpu.VMEM((1, 1), jnp.float32)],
        ),
        compiler_params=pltpu.CompilerParams(
            dimension_semantics=("parallel", "arbitrary")),
    )(xp2, xt2, mu, logvar)

    return jnp.sum(partials)   # add the two per-core partial means


def _reference(x_pred, mu, logvar, x_true):
    """Pure-JAX reference mirroring the PyTorch module semantics."""
    n = x_pred.shape[0]
    xp = x_pred.reshape(n, -1).astype(jnp.float32)
    xt = x_true.reshape(n, -1).astype(jnp.float32)
    log_p = jnp.maximum(jnp.log(xp), -100.0)
    log_1mp = jnp.maximum(jnp.log(1.0 - xp), -100.0)
    loss = jnp.sum(-(xt * log_p + (1.0 - xt) * log_1mp), axis=-1)
    kld = -0.5 * jnp.sum(1.0 + logvar - mu * mu - jnp.exp(logvar), axis=-1)
    return jnp.mean(loss + kld)


if __name__ == "__main__":
    key = jax.random.PRNGKey(0)
    k1, k2, k3, k4 = jax.random.split(key, 4)

    N, C, H, W = 2, 4, 16, 16   # decoder output shape [N, C, H, W]
    D = 32                      # latent dimensionality

    # x_pred in (0,1) (e.g. sigmoid decoder output), x_true binary targets.
    x_pred = jax.nn.sigmoid(jax.random.normal(k1, (N, C, H, W), jnp.float32))
    x_true = (jax.random.uniform(k2, (N, C, H, W)) > 0.5).astype(jnp.float32)
    mu = jax.random.normal(k3, (N, D), jnp.float32)
    logvar = 0.1 * jax.random.normal(k4, (N, D), jnp.float32)

    out = vae_loss(x_pred, mu, logvar, x_true)
    out = jax.block_until_ready(out)

    ref = _reference(x_pred, mu, logvar, x_true)
    assert jnp.allclose(out, ref, rtol=1e-5, atol=1e-3), (out, ref)

    print("KERNEL_OK")
</pallas_src>

<mosaic_0001>
module attributes {stable_mosaic.version = 11 : i64} {
  func.func @_vae_loss_kernel(%arg0: i32, %arg1: i32, %arg2: memref<8x256xf32, #tpu.memory_space<vmem>>, %arg3: memref<8x256xf32, #tpu.memory_space<vmem>>, %arg4: memref<2x32xf32, #tpu.memory_space<vmem>>, %arg5: memref<2x32xf32, #tpu.memory_space<vmem>>, %arg6: memref<1x1x1xf32, #tpu.memory_space<vmem>>, %arg7: memref<1x1xf32, #tpu.memory_space<vmem>>) attributes {dimension_semantics = [#tpu.dimension_semantics<parallel>, #tpu.dimension_semantics<arbitrary>], iteration_bounds = array<i64: 2, 1>, scalar_prefetch = 0 : i64, scratch_operands = 1 : i64, tpu.core_type = #tpu.core_type<tc>, window_params = [{transform_indices = @transform_0, window_bounds = array<i64: 8, 256>}, {transform_indices = @transform_1, window_bounds = array<i64: 8, 256>}, {pipeline_mode = #tpu.pipeline_mode<synchronous>, transform_indices = @transform_2, window_bounds = array<i64: 2, 32>}, {pipeline_mode = #tpu.pipeline_mode<synchronous>, transform_indices = @transform_3, window_bounds = array<i64: 2, 32>}, {transform_indices = @transform_4, window_bounds = array<i64: 1, 1, 1>}]} {
    %c0_i32 = arith.constant 0 : i32
    %0 = arith.cmpi eq, %arg1, %c0_i32 : i32
    %1 = arith.extui %0 : i1 to i32
    %c0_i32_0 = arith.constant 0 : i32
    %2 = arith.cmpi ne, %1, %c0_i32_0 : i32
    scf.if %2 {
      %cst_17 = arith.constant 0.000000e+00 : f32
      %34 = vector.broadcast %cst_17 : f32 to vector<1x1xf32>
      %c0_18 = arith.constant 0 : index
      %c0_19 = arith.constant 0 : index
      %35 = vector.load %arg7[%c0_18, %c0_19] : memref<1x1xf32, #tpu.memory_space<vmem>>, vector<1x1xf32>
      tpu.vector_store %arg7[%c0_18, %c0_19], %34 {strides = array<i32>} : memref<1x1xf32, #tpu.memory_space<vmem>>, vector<1x1xf32>,
    } else {
    }
    %c0 = arith.constant 0 : index
    %c0_1 = arith.constant 0 : index
    %3 = vector.load %arg2[%c0, %c0_1] : memref<8x256xf32, #tpu.memory_space<vmem>>, vector<8x256xf32>
    %c0_2 = arith.constant 0 : index
    %c0_3 = arith.constant 0 : index
    %4 = vector.load %arg3[%c0_2, %c0_3] : memref<8x256xf32, #tpu.memory_space<vmem>>, vector<8x256xf32>
    %5 = math.log %3 : vector<8x256xf32>
    %cst = arith.constant -1.000000e+02 : f32
    %6 = vector.broadcast %cst : f32 to vector<8x256xf32>
    %7 = arith.maximumf %5, %6 : vector<8x256xf32>
    %cst_4 = arith.constant 1.000000e+00 : f32
    %8 = vector.broadcast %cst_4 : f32 to vector<8x256xf32>
    %9 = arith.subf %8, %3 : vector<8x256xf32>
    %10 = math.log %9 : vector<8x256xf32>
    %cst_5 = arith.constant -1.000000e+02 : f32
    %11 = vector.broadcast %cst_5 : f32 to vector<8x256xf32>
    %12 = arith.maximumf %10, %11 : vector<8x256xf32>
    %13 = arith.subf %7, %12 : vector<8x256xf32>
    %14 = arith.mulf %4, %13 : vector<8x256xf32>
    %15 = arith.addf %14, %12 : vector<8x256xf32>
    %cst_6 = arith.constant 0.000000e+00 : f32
    %16 = vector.broadcast %cst_6 : f32 to vector<8x256xf32>
    %17 = arith.subf %16, %15 : vector<8x256xf32>
    %c0_7 = arith.constant 0 : index
    %c0_8 = arith.constant 0 : index
    %18 = vector.load %arg7[%c0_7, %c0_8] : memref<1x1xf32, #tpu.memory_space<vmem>>, vector<1x1xf32>
    %19 = vector.shape_cast %17 : vector<8x256xf32> to vector<1x8x256xf32>
    %cst_9 = arith.constant dense<0.000000e+00> : vector<1xf32>
    %20 = vector.multi_reduction <add>, %19, %cst_9 [1, 2] : vector<1x8x256xf32> to vector<1xf32>
    %21 = vector.shape_cast %20 : vector<1xf32> to vector<1x1x1xf32>
    %22 = vector.extract %21[0, 0, 0] : f32 from vector<1x1x1xf32>
    %23 = vector.broadcast %22 : f32 to vector<1x1xf32>
    %24 = arith.addf %18, %23 : vector<1x1xf32>
    %c0_10 = arith.constant 0 : index
    %c0_11 = arith.constant 0 : index
    %25 = vector.load %arg7[%c0_10, %c0_11] : memref<1x1xf32, #tpu.memory_space<vmem>>, vector<1x1xf32>
    tpu.vector_store %arg7[%c0_10, %c0_11], %24 {strides = array<i32>} : memref<1x1xf32, #tpu.memory_space<vmem>>, vector<1x1xf32>,
    %c0_i32_12 = arith.constant 0 : i32
    %26 = arith.cmpi eq, %arg1, %c0_i32_12 : i32
    %c0_i32_13 = arith.constant 0 : i32
    %27 = arith.cmpi eq, %arg0, %c0_i32_13 : i32
    %28 = arith.andi %26, %27 : i1
    %29 = arith.extui %28 : i1 to i32
    %c0_i32_14 = arith.constant 0 : i32
    %30 = arith.cmpi ne, %29, %c0_i32_14 : i32
    scf.if %30 {
      %c0_17 = arith.constant 0 : index
      %c0_18 = arith.constant 0 : index
      %34 = vector.load %arg4[%c0_17, %c0_18] : memref<2x32xf32, #tpu.memory_space<vmem>>, vector<2x32xf32>
      %c0_19 = arith.constant 0 : index
      %c0_20 = arith.constant 0 : index
      %35 = vector.load %arg5[%c0_19, %c0_20] : memref<2x32xf32, #tpu.memory_space<vmem>>, vector<2x32xf32>
      %c0_21 = arith.constant 0 : index
      %c0_22 = arith.constant 0 : index
      %36 = vector.load %arg7[%c0_21, %c0_22] : memref<1x1xf32, #tpu.memory_space<vmem>>, vector<1x1xf32>
      %cst_23 = arith.constant 1.000000e+00 : f32
      %37 = vector.broadcast %cst_23 : f32 to vector<2x32xf32>
      %38 = arith.addf %37, %35 : vector<2x32xf32>
      %39 = arith.mulf %34, %34 : vector<2x32xf32>
      %40 = arith.subf %38, %39 : vector<2x32xf32>
      %41 = math.exp %35 : vector<2x32xf32>
      %42 = arith.subf %40, %41 : vector<2x32xf32>
      %43 = vector.shape_cast %42 : vector<2x32xf32> to vector<1x2x32xf32>
      %cst_24 = arith.constant dense<0.000000e+00> : vector<1xf32>
      %44 = vector.multi_reduction <add>, %43, %cst_24 [1, 2] : vector<1x2x32xf32> to vector<1xf32>
      %45 = vector.shape_cast %44 : vector<1xf32> to vector<1x1x1xf32>
      %46 = vector.extract %45[0, 0, 0] : f32 from vector<1x1x1xf32>
      %cst_25 = arith.constant -5.000000e-01 : f32
      %47 = arith.mulf %cst_25, %46 : f32
      %48 = vector.broadcast %47 : f32 to vector<1x1xf32>
      %49 = arith.addf %36, %48 : vector<1x1xf32>
      %c0_26 = arith.constant 0 : index
      %c0_27 = arith.constant 0 : index
      %50 = vector.load %arg7[%c0_26, %c0_27] : memref<1x1xf32, #tpu.memory_space<vmem>>, vector<1x1xf32>
      tpu.vector_store %arg7[%c0_26, %c0_27], %49 {strides = array<i32>} : memref<1x1xf32, #tpu.memory_space<vmem>>, vector<1x1xf32>,
    } else {
    }
    %c0_i32_15 = arith.constant 0 : i32
    %31 = arith.cmpi eq, %arg1, %c0_i32_15 : i32
    %32 = arith.extui %31 : i1 to i32
    %c0_i32_16 = arith.constant 0 : i32
    %33 = arith.cmpi ne, %32, %c0_i32_16 : i32
    scf.if %33 {
      %c0_17 = arith.constant 0 : index
      %c0_18 = arith.constant 0 : index
      %34 = vector.load %arg7[%c0_17, %c0_18] : memref<1x1xf32, #tpu.memory_space<vmem>>, vector<1x1xf32>
      %cst_19 = arith.constant 5.000000e-01 : f32
      %35 = vector.broadcast %cst_19 : f32 to vector<1x1xf32>
      %36 = arith.mulf %34, %35 : vector<1x1xf32>
      %37 = vector.shape_cast %36 : vector<1x1xf32> to vector<1x1x1xf32>
      %c0_20 = arith.constant 0 : index
      %c0_21 = arith.constant 0 : index
      %c0_22 = arith.constant 0 : index
      %38 = vector.load %arg6[%c0_20, %c0_21, %c0_22] : memref<1x1x1xf32, #tpu.memory_space<vmem>>, vector<1x1x1xf32>
      tpu.vector_store %arg6[%c0_20, %c0_21, %c0_22], %37 {strides = array<i32>} : memref<1x1x1xf32, #tpu.memory_space<vmem>>, vector<1x1x1xf32>,
    } else {
    }
    return
  }
  func.func @transform_0(%arg0: i32, %arg1: i32) -> (i32, i32) {
    %c1_i32 = arith.constant 1 : i32
    %0 = arith.muli %arg0, %c1_i32 : i32
    %1 = arith.addi %0, %arg1 : i32
    %c0_i32 = arith.constant 0 : i32
    %c0_i32_0 = arith.constant 0 : i32
    return %c0_i32, %1 : i32, i32
  }
  func.func @transform_1(%arg0: i32, %arg1: i32) -> (i32, i32) {
    %c1_i32 = arith.constant 1 : i32
    %0 = arith.muli %arg0, %c1_i32 : i32
    %1 = arith.addi %0, %arg1 : i32
    %c0_i32 = arith.constant 0 : i32
    %c0_i32_0 = arith.constant 0 : i32
    return %c0_i32, %1 : i32, i32
  }
  func.func @transform_2(%arg0: i32, %arg1: i32) -> (i32, i32) {
    %c0_i32 = arith.constant 0 : i32
    %c0_i32_0 = arith.constant 0 : i32
    %c0_i32_1 = arith.constant 0 : i32
    return %c0_i32, %c0_i32_0 : i32, i32
  }
  func.func @transform_3(%arg0: i32, %arg1: i32) -> (i32, i32) {
    %c0_i32 = arith.constant 0 : i32
    %c0_i32_0 = arith.constant 0 : i32
    %c0_i32_1 = arith.constant 0 : i32
    return %c0_i32, %c0_i32_0 : i32, i32
  }
  func.func @transform_4(%arg0: i32, %arg1: i32) -> (i32, i32, i32) {
    %c0_i32 = arith.constant 0 : i32
    %c0_i32_0 = arith.constant 0 : i32
    %c0_i32_1 = arith.constant 0 : i32
    return %arg0, %c0_i32, %c0_i32_0 : i32, i32, i32
  }
}

</mosaic_0001>

<llo_original>
// kernel: tpu_custom_call.1
$region0: #{tpu_custom_call.1}
  #allocation0 [shape = 'u32[]', space=smem, size = 0x4, offset = 0x4, fixed_abs, tag = 'smem constant byte address 0x4 - core index']
  #allocation1 [shape = 'u32[72,128]{1,0:T(1,128)}', space=vmem, size = 0x9000, scoped, tag = 'internal scratch']
  #allocation2 [shape = 'f32[1,1]{1,0:T(1,128)}', space=vmem, size = 0x200, scoped, tag = 'scratch operand']
  %s0 = inlined_call_operand.hbm [shape: f32[8,512], index: 0, kind: input, shape index: {}]
  %s1 = inlined_call_operand.hbm [shape: f32[8,512], index: 1, kind: input, shape index: {}]
  %s2 = inlined_call_operand.hbm [shape: f32[2,32], index: 2, kind: input, shape index: {}]
  %s3 = inlined_call_operand.vmem [shape: f32[2,32], index: 3, kind: input, shape index: {}]
  %s4 = inlined_call_operand.vmem [shape: f32[2,1,1], index: 4, kind: output, shape index: {}]
  %s5 = sld [smem:[#allocation0]]
  $region73: #{tpu_custom_call.1} parent=0
    _
  %s7 = ssub.s32 1, %s5
  %s8 = scalar_select 0, %s7, %s5
  $region1: #{tpu_custom_call.1} parent=0
    #allocation3 [shape = 'u8[16384]{0}', space=vmem, size = 0x4000, scoped, tag = 'input window, operand 0']
    #allocation4 [shape = 's32[2]{0}', space=sflag, size = 0x8, scoped, tag = 'scoped memory for tpu_custom_call.1']
    #allocation5 [shape = 'u8[16384]{0}', space=vmem, size = 0x4000, scoped, tag = 'input window, operand 1']
    #allocation6 [shape = 's32[2]{0}', space=sflag, size = 0x8, scoped, tag = 'scoped memory for tpu_custom_call.1']
    #allocation7 [shape = 'u8[1024]{0}', space=vmem, size = 0x400, scoped, tag = 'input window, operand 2, single buffered']
    %9 = vsyncpa [#allocation4], 0
    %s10 = scalar_lea.sflag [#allocation4], 1
    %11 = vsyncpa %s10, 0
    %12 = vsyncpa [#allocation6], 0
    %s13 = scalar_lea.sflag [#allocation6], 1
    %14 = vsyncpa %s13, 0
    loop: start=0, step=1, limit=4
    $region2: #{tpu_custom_call.1} parent=1 // loop_pre_header
      _
    $region3: #{tpu_custom_call.1} parent=1 // loop_header
      %s16 = sphi 0, %s20
      %p17 = scmp.ge.s32.totalorder %s16, 4
      %s23 = sphi 0, %s35
      %s24 = sphi 0, %s31
      %s25 = sphi 0, %s23
      %s26 = sphi 0, %s24
      %s27 = sphi 0, %s25
      %s28 = sphi 0, %s26
      %s40 = sphi 0, %s42
      %s43 = sphi 0, %s40
      %s44 = sphi 0, %s43
      %s60 = sphi 0, %s44
      %s68 = sphi 0, %s70
      %s71 = sphi 0, %s68
      %s72 = sphi 0, %s71
      %s88 = sphi 0, %s72
      %s92 = sphi 0, %s92
      %s94 = sphi 0, %s92
      %s95 = sphi 0, %s94
      %s109 = sphi 0, %s95
      %s113 = sphi 0, %s113
      %s115 = sphi 0, %s113
      %s116 = sphi 0, %s115
      %s130 = sphi 0, %s116
      %s136 = sphi 0, %s138
      %s139 = sphi 0, %s136
      %s140 = sphi 0, %s139
      %s156 = sphi 0, %s140
    $region4: #{tpu_custom_call.1} parent=1 // loop_header_branch
      %19 = sbr.rel (%p17) target = $region8
    $region5: #{tpu_custom_call.1} parent=1 // loop_body
      %s21 = ssub.s32 %s16, 1
      %s22 = ssub.s32 %s16, 2
      %s29 = sadd.s32 1, %s24
      %p30 = scmp.ge.s32.totalorder %s29, 1
      %s31 = scalar_select %p30, 0, %s29
      %s32 = sadd.s32 1, %s23
      %s33 = scalar_select %p30, %s32, %s23
      %p34 = scmp.ge.s32.totalorder %s33, 2
      %s35 = scalar_select %p34, 0, %s33
      %s36 = sadd.s32 %s23, %s24
      %s37 = sadd.s32 %s35, %s31
      %s38 = ssub.s32 %s36, %s37
      %p39 = scmp.eq.s32.totalorder %s38, 0
      %s41 = sadd.s32 %s40, 1
      %s42 = scalar_select %p39, %s40, %s41
      %p45 = pneg %p39
      %p46 = scmp.eq.s32.totalorder %s16, 1
      %p47 = por %p45, %p46
      %p48 = scmp.ne.s32.totalorder %s40, %s43
      %p49 = scmp.eq.s32.totalorder %s16, 0
      %p50 = por %p48, %p49
      %p51 = scmp.ne.s32.totalorder %s40, %s43
      %p52 = scmp.eq.s32.totalorder %s21, 1
      %p53 = por %p51, %p52
      %p54 = scmp.ne.s32.totalorder %s43, %s44
      %p55 = scmp.eq.s32.totalorder %s21, 0
      %p56 = por %p54, %p55
      %p57 = scmp.ne.s32.totalorder %s43, %s44
      %p58 = scmp.eq.s32.totalorder %s22, 1
      %p59 = por %p57, %p58
      %p61 = scmp.ne.s32.totalorder %s44, %s60
      %p62 = scmp.eq.s32.totalorder %s22, 0
      %p63 = por %p61, %p62
      %s64 = sadd.s32 %s23, %s24
      %s65 = sadd.s32 %s35, %s31
      %s66 = ssub.s32 %s64, %s65
      %p67 = scmp.eq.s32.totalorder %s66, 0
      %s69 = sadd.s32 %s68, 1
      %s70 = scalar_select %p67, %s68, %s69
      %p73 = pneg %p67
      %p74 = scmp.eq.s32.totalorder %s16, 1
      %p75 = por %p73, %p74
      %p76 = scmp.ne.s32.totalorder %s68, %s71
      %p77 = scmp.eq.s32.totalorder %s16, 0
      %p78 = por %p76, %p77
      %p79 = scmp.ne.s32.totalorder %s68, %s71
      %p80 = scmp.eq.s32.totalorder %s21, 1
      %p81 = por %p79, %p80
      %p82 = scmp.ne.s32.totalorder %s71, %s72
      %p83 = scmp.eq.s32.totalorder %s21, 0
      %p84 = por %p82, %p83
      %p85 = scmp.ne.s32.totalorder %s71, %s72
      %p86 = scmp.eq.s32.totalorder %s22, 1
      %p87 = por %p85, %p86
      %p89 = scmp.ne.s32.totalorder %s72, %s88
      %p90 = scmp.eq.s32.totalorder %s22, 0
      %p91 = por %p89, %p90
      %s93 = sadd.s32 %s92, 1
      %p96 = scmp.eq.s32.totalorder %s16, 1
      %p97 = scmp.ne.s32.totalorder %s92, %s94
      %p98 = scmp.eq.s32.totalorder %s16, 0
      %p99 = por %p97, %p98
      %p100 = scmp.ne.s32.totalorder %s92, %s94
      %p101 = scmp.eq.s32.totalorder %s21, 1
      %p102 = por %p100, %p101
      %p103 = scmp.ne.s32.totalorder %s94, %s95
      %p104 = scmp.eq.s32.totalorder %s21, 0
      %p105 = por %p103, %p104
      %p106 = scmp.ne.s32.totalorder %s94, %s95
      %p107 = scmp.eq.s32.totalorder %s22, 1
      %p108 = por %p106, %p107
      %p110 = scmp.ne.s32.totalorder %s95, %s109
      %p111 = scmp.eq.s32.totalorder %s22, 0
      %p112 = por %p110, %p111
      %s114 = sadd.s32 %s113, 1
      %p117 = scmp.eq.s32.totalorder %s16, 1
      %p118 = scmp.ne.s32.totalorder %s113, %s115
      %p119 = scmp.eq.s32.totalorder %s16, 0
      %p120 = por %p118, %p119
      %p121 = scmp.ne.s32.totalorder %s113, %s115
      %p122 = scmp.eq.s32.totalorder %s21, 1
      %p123 = por %p121, %p122
      %p124 = scmp.ne.s32.totalorder %s115, %s116
      %p125 = scmp.eq.s32.totalorder %s21, 0
      %p126 = por %p124, %p125
      %p127 = scmp.ne.s32.totalorder %s115, %s116
      %p128 = scmp.eq.s32.totalorder %s22, 1
      %p129 = por %p127, %p128
      %p131 = scmp.ne.s32.totalorder %s116, %s130
      %p132 = scmp.eq.s32.totalorder %s22, 0
      %p133 = por %p131, %p132
      %s134 = ssub.s32 %s23, %s35
      %p135 = scmp.eq.s32.totalorder %s134, 0
      %s137 = sadd.s32 %s136, 1
      %s138 = scalar_select %p135, %s136, %s137
      %p141 = pneg %p135
      %p142 = scmp.eq.s32.totalorder %s16, 1
      %p143 = por %p141, %p142
      %p144 = scmp.ne.s32.totalorder %s136, %s139
      %p145 = scmp.eq.s32.totalorder %s16, 0
      %p146 = por %p144, %p145
      %p147 = scmp.ne.s32.totalorder %s136, %s139
      %p148 = scmp.eq.s32.totalorder %s21, 1
      %p149 = por %p147, %p148
      %p150 = scmp.ne.s32.totalorder %s139, %s140
      %p151 = scmp.eq.s32.totalorder %s21, 0
      %p152 = por %p150, %p151
      %p153 = scmp.ne.s32.totalorder %s139, %s140
      %p154 = scmp.eq.s32.totalorder %s22, 1
      %p155 = por %p153, %p154
      %p157 = scmp.ne.s32.totalorder %s140, %s156
      %p158 = scmp.eq.s32.totalorder %s22, 0
      %p159 = por %p157, %p158
      %p160 = scmp.le.s32.totalorder 1, %s16
      %p161 = scmp.lt.s32.totalorder %s16, 3
      %p162 = pnand %p160, %p161
      %p163 = pneg %p162
      // Predicated region
      $region9: #{tpu_custom_call.1} parent=5 // pred_check
        _
      $region10: #{tpu_custom_call.1} parent=5 // pred_check_branch
        %165 = sbr.rel (%p162) target = $region12
      $region11: #{tpu_custom_call.1} parent=5 // pred_region
        %s166 = ssub.s32 %s16, 1
        // Predicated region
        $region13: #{tpu_custom_call.1} parent=11 // pred_check
          %p167 = pneg %p105
        $region14: #{tpu_custom_call.1} parent=11 // pred_check_branch
          %169 = sbr.rel (%p167) target = $region16
        $region15: #{tpu_custom_call.1} parent=11 // pred_region
          %171 = vsyncadd [#allocation6], 0
          %s173 = sshll.u32 %s2, 4
          %s174 = int_to_ptr.hbm [resolvable:$true] %s173
          %s175 = sshll.u32 [#allocation7], 4
          %s176 = int_to_ptr.vmem [resolvable:$true] %s175
          %178 = dma.hbm_to_vmem [thread:$0]  %s174, 32, %s176, [#allocation6]
        $region16: #{tpu_custom_call.1} parent=11 // pred_fallthru
          _
        // Predicated region
        $region17: #{tpu_custom_call.1} parent=11 // pred_check
          %p179 = pneg %p126
        $region18: #{tpu_custom_call.1} parent=11 // pred_check_branch
          %181 = sbr.rel (%p179) target = $region20
        $region19: #{tpu_custom_call.1} parent=11 // pred_region
          _
        $region20: #{tpu_custom_call.1} parent=11 // pred_fallthru
          _
      $region12: #{tpu_custom_call.1} parent=5 // pred_fallthru
        _
      %p182 = scmp.lt.s32.totalorder %s16, 2
      // Predicated region
      $region21: #{tpu_custom_call.1} parent=5 // pred_check
        %p183 = pneg %p182
      $region22: #{tpu_custom_call.1} parent=5 // pred_check_branch
        %185 = sbr.rel (%p183) target = $region24
      $region23: #{tpu_custom_call.1} parent=5 // pred_region
        // Predicated region
        $region25: #{tpu_custom_call.1} parent=23 // pred_check
          %p186 = pneg %p50
        $region26: #{tpu_custom_call.1} parent=23 // pred_check_branch
          %188 = sbr.rel (%p186) target = $region28
        $region27: #{tpu_custom_call.1} parent=23 // pred_region
          %s189 = sand.u32 %s40, 1
          %s190 = scalar_lea.sflag [#allocation4], %s189
          %s191 = sand.u32 %s40, 1
          %s192 = smul.addr %s191, 16
          %s193 = scalar_lea.vmem [#allocation3], %s192
          %s194 = sadd.s32 %s23, %s24
          %s195 = smul.u32 2, %s194
          %197 = vsyncadd %s190, 0
          %s198 = smul.addr %s195, 8
          %s199 = scalar_lea.hbm %s0, %s198
          %s201 = sshll.u32 %s199, 4
          %s202 = int_to_ptr.hbm [resolvable:$true] %s201
          %s203 = sshll.u32 %s193, 4
          %s204 = int_to_ptr.vmem [resolvable:$true] %s203
          %206 = dma.hbm_to_vmem [thread:$0]  %s202, 256, %s204, %s190
        $region28: #{tpu_custom_call.1} parent=23 // pred_fallthru
          _
        // Predicated region
        $region29: #{tpu_custom_call.1} parent=23 // pred_check
          %p207 = pneg %p78
        $region30: #{tpu_custom_call.1} parent=23 // pred_check_branch
          %209 = sbr.rel (%p207) target = $region32
        $region31: #{tpu_custom_call.1} parent=23 // pred_region
          %s210 = sand.u32 %s16, 1
          %s211 = scalar_lea.sflag [#allocation6], %s210
          %s212 = sand.u32 %s68, 1
          %s213 = smul.addr %s212, 16
          %s214 = scalar_lea.vmem [#allocation5], %s213
          %s215 = sadd.s32 %s23, %s24
          %s216 = smul.u32 2, %s215
          %218 = vsyncadd %s211, 0
          %s219 = smul.addr %s216, 8
          %s220 = scalar_lea.hbm %s1, %s219
          %s222 = sshll.u32 %s220, 4
          %s223 = int_to_ptr.hbm [resolvable:$true] %s222
          %s224 = sshll.u32 %s214, 4
          %s225 = int_to_ptr.vmem [resolvable:$true] %s224
          %227 = dma.hbm_to_vmem [thread:$0]  %s223, 256, %s225, %s211
        $region32: #{tpu_custom_call.1} parent=23 // pred_fallthru
          _
      $region24: #{tpu_custom_call.1} parent=5 // pred_fallthru
        _
      %p228 = scmp.le.s32.totalorder 1, %s16
      %p229 = scmp.lt.s32.totalorder %s16, 3
      %p230 = pnand %p228, %p229
      %p231 = pneg %p230
      // Predicated region
      $region33: #{tpu_custom_call.1} parent=5 // pred_check
        _
      $region34: #{tpu_custom_call.1} parent=5 // pred_check_branch
        %233 = sbr.rel (%p230) target = $region36
      $region35: #{tpu_custom_call.1} parent=5 // pred_region
        %s234 = ssub.s32 %s16, 1
        %s235 = sand.u32 %s43, 1
        %s236 = scalar_lea.sflag [#allocation4], %s235
        %s237 = sand.u32 %s43, 1
        %s238 = smul.addr %s237, 16
        %s239 = scalar_lea.vmem [#allocation3], %s238
        // Predicated region
        $region37: #{tpu_custom_call.1} parent=35 // pred_check
          %p240 = pneg %p56
        $region38: #{tpu_custom_call.1} parent=35 // pred_check_branch
          %242 = sbr.rel (%p240) target = $region40
        $region39: #{tpu_custom_call.1} parent=35 // pred_region
          %244 = dma.done %s236, 256
        $region40: #{tpu_custom_call.1} parent=35 // pred_fallthru
          _
        %s245 = sand.u32 %s21, 1
        %s246 = scalar_lea.sflag [#allocation6], %s245
        %s247 = sand.u32 %s71, 1
        %s248 = smul.addr %s247, 16
        %s249 = scalar_lea.vmem [#allocation5], %s248
        // Predicated region
        $region41: #{tpu_custom_call.1} parent=35 // pred_check
          %p250 = pneg %p84
        $region42: #{tpu_custom_call.1} parent=35 // pred_check_branch
          %252 = sbr.rel (%p250) target = $region44
        $region43: #{tpu_custom_call.1} parent=35 // pred_region
          %254 = dma.done %s246, 256
        $region44: #{tpu_custom_call.1} parent=35 // pred_fallthru
          _
        // Predicated region
        $region45: #{tpu_custom_call.1} parent=35 // pred_check
          %p255 = pneg %p105
        $region46: #{tpu_custom_call.1} parent=35 // pred_check_branch
          %257 = sbr.rel (%p255) target = $region48
        $region47: #{tpu_custom_call.1} parent=35 // pred_region
          %259 = dma.done [#allocation6], 32
        $region48: #{tpu_custom_call.1} parent=35 // pred_fallthru
          _
        %s260 = sand.u32 %s43, 1
        %s261 = scalar_lea.sflag [#allocation4], %s260
        %s262 = sand.u32 %s43, 1
        %s263 = smul.addr %s262, 16
        %s264 = scalar_lea.vmem [#allocation3], %s263
        %p265 = pneg %p56
        %p266 = pneg %p53
        %s267 = sand.u32 %s21, 1
        %s268 = scalar_lea.sflag [#allocation6], %s267
        %s269 = sand.u32 %s71, 1
        %s270 = smul.addr %s269, 16
        %s271 = scalar_lea.vmem [#allocation5], %s270
        %p272 = pneg %p84
        %p273 = pneg %p81
        %p274 = pneg %p105
        %p275 = pneg %p102
        %p276 = pneg %p126
        %p277 = pneg %p123
        %p278 = pneg %p152
        %p279 = pneg %p149
        %p280 = scmp.lt.s32.totalorder %s25, 1
        %s281 = scalar_select %p280, %s25, 1
        %s282 = scalar_lea.vmem %s4, %s281
        %s283 = sadd.s32 %s25, %s26
        %s284 = smul.u32 2, %s283
        %s285 = sadd.s32 %s25, %s26
        %s286 = smul.u32 2, %s285
        %p287 = scmp.lt.s32.totalorder %s25, 1
        %s288 = scalar_select %p287, %s25, 1
        %s289 = scalar_lea.vmem %s4, %s288
        %p290 = scmp.eq.s32.totalorder %s26, 0
        // Predicated region
        $region49: #{tpu_custom_call.1} parent=35 // pred_check
          %p291 = pneg %p290
        $region50: #{tpu_custom_call.1} parent=35 // pred_check_branch
          %293 = sbr.rel (%p291) target = $region52
        $region51: #{tpu_custom_call.1} parent=35 // pred_region
          %vm294 = vcmask 0
          %295 = vst.msk [vmem:[#allocation2] sm:$0x1] %vm294, 0.0
        $region52: #{tpu_custom_call.1} parent=35 // pred_fallthru
          _
        %v296 = vld [vmem:[%s239] sm:$0xff]
        %v297 = vld [vmem:[%s239 + $0x8] sm:$0xff]
        %v298 = vld [vmem:[%s249] sm:$0xff]
        %v299 = vld [vmem:[%s249 + $0x8] sm:$0xff]
        %v300 = vlog2.pop %v296
        %v301 = vmul.f32 %v300, 0.6931472
        %v302 = vlog2.pop %v297
        %v303 = vmul.f32 %v302, 0.6931472
        %v304 = vmax.f32 %v301, -100.0
        %v305 = vmax.f32 %v303, -100.0
        %v306 = vsub.f32 1.0, %v296
        %v307 = vsub.f32 1.0, %v297
        %v308 = vlog2.pop %v306
        %v309 = vmul.f32 %v308, 0.6931472
        %v310 = vlog2.pop %v307
        %v311 = vmul.f32 %v310, 0.6931472
        %v312 = vmax.f32 %v309, -100.0
        %v313 = vmax.f32 %v311, -100.0
        %v314 = vsub.f32 %v304, %v312
        %v315 = vsub.f32 %v305, %v313
        %v316 = vmul.f32 %v298, %v314
        %v317 = vmul.f32 %v299, %v315
        %v318 = vadd.f32 %v316, %v312
        %v319 = vadd.f32 %v317, %v313
        %v320 = vsub.f32 0.0, %v318
        %v321 = vsub.f32 0.0, %v319
        %v322 = vld [vmem:[#allocation2] sm:$0x1]
        %v323 = vadd.f32 %v320, %v321
        %324 = vadd.xlane.f32.xlu0 %v323
        %v325 = vpop.xlane.xlu0 %324
        %v326 = vrot.slane %v325, 4
        %v327 = vadd.f32 %v325, %v326
        %v328 = vrot.slane %v327, 2
        %v329 = vadd.f32 %v327, %v328
        %v330 = vrot.slane %v329, 1
        %v331 = vadd.f32 %v329, %v330
        %s332 = vtos %v331
        %v333 = vstv %s332
        %v334 = vadd.f32 %v322, %v333
        %vm335 = vcmask 0
        %336 = vst.msk [vmem:[#allocation2] sm:$0x1] %vm335, %v334
        %p337 = scmp.eq.s32.totalorder %s25, 0
        %p338 = pnand %p290, %p337
        %p339 = pneg %p338
        // Predicated region
        $region53: #{tpu_custom_call.1} parent=35 // pred_check
          _
        $region54: #{tpu_custom_call.1} parent=35 // pred_check_branch
          %341 = sbr.rel (%p338) target = $region56
        $region55: #{tpu_custom_call.1} parent=35 // pred_region
          %v342 = vld [vmem:[#allocation7] sm:$0x3]
          %v343 = vld [vmem:[%s3] sm:$0x3]
          %v344 = vld [vmem:[#allocation2] sm:$0x1]
          %v345 = vadd.f32 %v343, 1.0
          %v346 = vmul.f32 %v342, %v342
          %v347 = vsub.f32 %v345, %v346
          %v348 = vmul.f32 %v343, 1.442695
          %v349 = vpow.pop %v348
          %v350 = vsub.f32 %v347, %v349
          %vm351 = vcmask 254976
          %v352 = vsel %vm351, %v350, 0.0
          %353 = vadd.xlane.f32.xlu0 %v352
          %v354 = vpop.xlane.xlu0 %353
          %v355 = vrot.slane %v354, 4
          %v356 = vadd.f32 %v354, %v355
          %v357 = vrot.slane %v356, 2
          %v358 = vadd.f32 %v356, %v357
          %v359 = vrot.slane %v358, 1
          %v360 = vadd.f32 %v358, %v359
          %s361 = vtos %v360
          %s362 = smul.f32 %s361, -0.5
          %v363 = vstv %s362
          %v364 = vadd.f32 %v344, %v363
          %365 = vst.msk [vmem:[#allocation2] sm:$0x1] %vm335, %v364
        $region56: #{tpu_custom_call.1} parent=35 // pred_fallthru
          _
        // Predicated region
        $region57: #{tpu_custom_call.1} parent=35 // pred_check
          %p366 = pneg %p290
        $region58: #{tpu_custom_call.1} parent=35 // pred_check_branch
          %368 = sbr.rel (%p366) target = $region60
        $region59: #{tpu_custom_call.1} parent=35 // pred_region
          %v369 = vld [vmem:[#allocation2] sm:$0x1]
          %v370 = vmul.f32 %v369, 0.5
          %371 = vst.msk [vmem:[%s289] sm:$0x1] %vm335, %v370
        $region60: #{tpu_custom_call.1} parent=35 // pred_fallthru
          _
        %p372 = scmp.lt.s32.totalorder %s25, 1
        %s373 = scalar_select %p372, %s25, 1
        %s374 = scalar_lea.vmem %s4, %s373
        // Predicated region
        $region61: #{tpu_custom_call.1} parent=35 // pred_check
          %p375 = pneg %p149
        $region62: #{tpu_custom_call.1} parent=35 // pred_check_branch
          %377 = sbr.rel (%p375) target = $region64
        $region63: #{tpu_custom_call.1} parent=35 // pred_region
          _
        $region64: #{tpu_custom_call.1} parent=35 // pred_fallthru
          _
      $region36: #{tpu_custom_call.1} parent=5 // pred_fallthru
        _
      %p378 = scmp.le.s32.totalorder 2, %s16
      // Predicated region
      $region65: #{tpu_custom_call.1} parent=5 // pred_check
        %p379 = pneg %p378
      $region66: #{tpu_custom_call.1} parent=5 // pred_check_branch
        %381 = sbr.rel (%p379) target = $region68
      $region67: #{tpu_custom_call.1} parent=5 // pred_region
        %s382 = ssub.s32 %s16, 2
        // Predicated region
        $region69: #{tpu_custom_call.1} parent=67 // pred_check
          %p383 = pneg %p155
        $region70: #{tpu_custom_call.1} parent=67 // pred_check_branch
          %385 = sbr.rel (%p383) target = $region72
        $region71: #{tpu_custom_call.1} parent=67 // pred_region
          %p386 = scmp.lt.s32.totalorder %s27, 1
          %s387 = scalar_select %p386, %s27, 1
          %s388 = scalar_lea.vmem %s4, %s387
        $region72: #{tpu_custom_call.1} parent=67 // pred_fallthru
          _
      $region68: #{tpu_custom_call.1} parent=5 // pred_fallthru
        _
    $region6: #{tpu_custom_call.1} parent=1 // loop_footer
      %s20 = sadd.s32 1, %s16
    $region7: #{tpu_custom_call.1} parent=1 // loop_footer_branch
      %15 = sbr.rel target = $region3
    $region8: #{tpu_custom_call.1} parent=1 // loop_exit
      _
    %389 = vsyncpa [#allocation4], 1
    %s390 = scalar_lea.sflag [#allocation4], 1
    %391 = vsyncpa %s390, 1
    %392 = vsyncpa [#allocation6], 1
    %s393 = scalar_lea.sflag [#allocation6], 1
    %394 = vsyncpa %s393, 1

</llo_original>
